<compile_context>
chip_gen: v5e
topology: v5e:2x2
jax: 0.10.0
libtpu: 0.0.40
codegen_flags: <defaults>
</compile_context>

<pallas_src>
import math

import jax
import jax.numpy as jnp
from jax.experimental import pallas as pl
from jax.experimental.pallas import tpu as pltpu

CANDIDATE_WIDTH = [16, 32, 64, 96]
MAX_WIDTH = 168
NUM_CLASSES = 10
LANES = 128  # TPU vreg lane width


def _round_up(n, m):
    return ((n + m - 1) // m) * m


def classifier_kernel(x_ref, w_ref, bias_ref, out_ref):
    # x_ref:    (TB, K)      bf16 (or f32) — flattened (C*HW) activations
    # w_ref:    (K, NC_PAD)  same dtype as x — P.T replicated over HW, pre-scaled by 1/HW
    # bias_ref: (1, NC_PAD)  f32, zero past num_classes
    # out_ref:  (TB, NC_PAD) f32
    out_ref[...] = jnp.dot(x_ref[...], w_ref[...],
                           preferred_element_type=jnp.float32) + bias_ref[...]


def classifier_block_forward(x, kernel, q_k_list, bias, arch, *,
                             tb_target=512, use_bf16=True):
    """x: (B, C, H, W) NCHW with C == CANDIDATE_WIDTH[arch].

    Returns logits (B, num_classes), f32.
    """
    q = jax.lax.stop_gradient(q_k_list[arch])        # matches Q_k[arch].detach()
    B, C, H, W = x.shape
    HW = H * W
    K = C * HW
    assert C == q.shape[1], "channel count must match candidate width for arch"
    num_classes = kernel.shape[0]
    nc_pad = _round_up(max(num_classes, LANES), LANES)   # lane-dense output

    # ---- batch-independent weight prep (hoisted out of the hot kernel) ----
    pk = jnp.dot(kernel.astype(jnp.float32), q.astype(jnp.float32))    # (NC, C)
    pk_t = pk.T * (1.0 / HW)                                           # (C, NC), pooling scale folded in
    w_big = jnp.repeat(pk_t, HW, axis=0)                               # (K, NC): row c*HW+s <- pk_t[c]
    w_pad = jnp.zeros((K, nc_pad), jnp.float32).at[:, :num_classes].set(w_big)
    if bias is None:
        bias_pad = jnp.zeros((1, nc_pad), jnp.float32)
    else:
        bias_pad = jnp.zeros((1, nc_pad), jnp.float32).at[:, :num_classes].set(
            bias.astype(jnp.float32))

    # x is the dominant HBM stream: hand it to the kernel lane-dense and (by
    # default) in bf16.  Reshape is a free metadata change for contiguous NCHW.
    mm_dtype = jnp.bfloat16 if use_bf16 else jnp.float32
    x2 = x.reshape(B, K).astype(mm_dtype)
    w_pad = w_pad.astype(mm_dtype)

    # ---- batch tiling ----
    # Biggest tile up to tb_target (multiple of 8 sublanes), clamped so the
    # parallel batch grid has >= 2 steps when B allows it (v7x: both TCs busy).
    # No padding of x: the ragged last block's extra rows are masked on
    # writeback; each output row depends only on its own input row.
    tb = min(_round_up(tb_target, 8), max(8, _round_up(pl.cdiv(B, 2), 8)))
    grid = (pl.cdiv(B, tb),)

    out = pl.pallas_call(
        classifier_kernel,
        out_shape=jax.ShapeDtypeStruct((B, nc_pad), jnp.float32),
        grid=grid,
        in_specs=[
            pl.BlockSpec((tb, K), lambda i: (i, 0)),        # streamed activations
            pl.BlockSpec((K, nc_pad), lambda i: (0, 0)),    # resident weights
            pl.BlockSpec((1, nc_pad), lambda i: (0, 0)),    # resident bias
        ],
        out_specs=pl.BlockSpec((tb, nc_pad), lambda i: (i, 0)),
        compiler_params=pltpu.CompilerParams(
            dimension_semantics=("parallel",)),             # megacore on v7x
    )(x2, w_pad, bias_pad)

    # Strip lane padding.
    return out[:, :num_classes]
    # NOTE: at tiny demo shapes the pallas_call dispatch dominates; in a real
    # model this head should be fused with the preceding layer's kernel.


def init_params(key):
    """Deterministic init mirroring reset_parameters(): kaiming_uniform with
    a=sqrt(5) on a 2-D weight reduces to U(-1/sqrt(fan_in), 1/sqrt(fan_in))."""
    k_kernel, k_bias, k_q = jax.random.split(key, 3)

    bound_k = 1.0 / math.sqrt(MAX_WIDTH)      # fan_in of kernel = max_width
    kernel = jax.random.uniform(k_kernel, (NUM_CLASSES, MAX_WIDTH),
                                minval=-bound_k, maxval=bound_k,
                                dtype=jnp.float32)
    bias = jax.random.uniform(k_bias, (NUM_CLASSES,),
                              minval=-bound_k, maxval=bound_k,
                              dtype=jnp.float32)
    q_k_list = []
    for i, cand in enumerate(CANDIDATE_WIDTH):
        bq = 1.0 / math.sqrt(cand)            # fan_in of Q_k[i] = cand
        q_k_list.append(
            jax.random.uniform(jax.random.fold_in(k_q, i), (MAX_WIDTH, cand),
                               minval=-bq, maxval=bq, dtype=jnp.float32))
    return kernel, bias, q_k_list


if __name__ == "__main__":
    key = jax.random.PRNGKey(0)
    k_params, k_x = jax.random.split(key)

    kernel, bias, q_k_list = init_params(k_params)

    arch = 1                                  # -> candidate width 32
    B, C, H, W = 2, CANDIDATE_WIDTH[arch], 8, 8
    x = jax.random.normal(k_x, (B, C, H, W), dtype=jnp.float32)

    logits = classifier_block_forward(x, kernel, q_k_list, bias, arch)
    logits = jax.block_until_ready(logits)

    # Pure-JAX f32 reference of the same math (kernel path uses bf16 inputs
    # with f32 accumulation -> compare with bf16-appropriate tolerance).
    h_ref = jnp.mean(x, axis=(2, 3))
    pk_ref = kernel @ q_k_list[arch]
    ref = h_ref @ pk_ref.T + bias[None, :]
    assert logits.shape == (B, NUM_CLASSES)
    assert jnp.allclose(logits, ref, atol=1e-2, rtol=1e-2)

    # Also verify the exact-precision path (f32 end to end).
    logits_f32 = jax.block_until_ready(
        classifier_block_forward(x, kernel, q_k_list, bias, arch, use_bf16=False))
    assert jnp.allclose(logits_f32, ref, atol=1e-4, rtol=1e-4)

    print("KERNEL_OK")
</pallas_src>

<mosaic_0001>
module attributes {stable_mosaic.version = 11 : i64} {
  func.func @classifier_kernel(%arg0: i32, %arg1: memref<8x2048xbf16, #tpu.memory_space<vmem>>, %arg2: memref<2048x128xbf16, #tpu.memory_space<vmem>>, %arg3: memref<1x128xf32, #tpu.memory_space<vmem>>, %arg4: memref<8x128xf32, #tpu.memory_space<vmem>>) attributes {dimension_semantics = [#tpu.dimension_semantics<parallel>], iteration_bounds = array<i64: 1>, scalar_prefetch = 0 : i64, scratch_operands = 0 : i64, tpu.core_type = #tpu.core_type<tc>, window_params = [{transform_indices = @transform_0, window_bounds = array<i64: 8, 2048>}, {pipeline_mode = #tpu.pipeline_mode<synchronous>, transform_indices = @transform_1, window_bounds = array<i64: 2048, 128>}, {pipeline_mode = #tpu.pipeline_mode<synchronous>, transform_indices = @transform_2, window_bounds = array<i64: 1, 128>}, {transform_indices = @transform_3, window_bounds = array<i64: 8, 128>}]} {
    %c0 = arith.constant 0 : index
    %c0_0 = arith.constant 0 : index
    %0 = vector.load %arg1[%c0, %c0_0] : memref<8x2048xbf16, #tpu.memory_space<vmem>>, vector<8x2048xbf16>
    %c0_1 = arith.constant 0 : index
    %c0_2 = arith.constant 0 : index
    %1 = vector.load %arg2[%c0_1, %c0_2] : memref<2048x128xbf16, #tpu.memory_space<vmem>>, vector<2048x128xbf16>
    %cst = arith.constant dense<0.000000e+00> : vector<8x128xf32>
    %2 = tpu.matmul %0, %1, %cst {dimension_numbers = #tpu.dot_dimension_numbers<[1], [0], [0], [1], [0, 0, 1, 1], [], []>} : vector<8x2048xbf16>, vector<2048x128xbf16>, vector<8x128xf32> -> vector<8x128xf32>
    %c0_3 = arith.constant 0 : index
    %c0_4 = arith.constant 0 : index
    %3 = vector.load %arg3[%c0_3, %c0_4] : memref<1x128xf32, #tpu.memory_space<vmem>>, vector<1x128xf32>
    %4 = vector.broadcast %3 : vector<1x128xf32> to vector<8x128xf32>
    %5 = arith.addf %2, %4 : vector<8x128xf32>
    %c0_5 = arith.constant 0 : index
    %c0_6 = arith.constant 0 : index
    %6 = vector.load %arg4[%c0_5, %c0_6] : memref<8x128xf32, #tpu.memory_space<vmem>>, vector<8x128xf32>
    tpu.vector_store %arg4[%c0_5, %c0_6], %5 {strides = array<i32>} : memref<8x128xf32, #tpu.memory_space<vmem>>, vector<8x128xf32>,
    return
  }
  func.func @transform_0(%arg0: i32) -> (i32, i32) {
    %c0_i32 = arith.constant 0 : i32
    %c0_i32_0 = arith.constant 0 : i32
    return %arg0, %c0_i32 : i32, i32
  }
  func.func @transform_1(%arg0: i32) -> (i32, i32) {
    %c0_i32 = arith.constant 0 : i32
    %c0_i32_0 = arith.constant 0 : i32
    %c0_i32_1 = arith.constant 0 : i32
    return %c0_i32, %c0_i32_0 : i32, i32
  }
  func.func @transform_2(%arg0: i32) -> (i32, i32) {
    %c0_i32 = arith.constant 0 : i32
    %c0_i32_0 = arith.constant 0 : i32
    %c0_i32_1 = arith.constant 0 : i32
    return %c0_i32, %c0_i32_0 : i32, i32
  }
  func.func @transform_3(%arg0: i32) -> (i32, i32) {
    %c0_i32 = arith.constant 0 : i32
    %c0_i32_0 = arith.constant 0 : i32
    return %arg0, %c0_i32 : i32, i32
  }
}

</mosaic_0001>

<llo_original>
// kernel: tpu_custom_call.1
$region0: #{tpu_custom_call.1}
  #allocation0 [shape = 'u32[]', space=smem, size = 0x4, offset = 0x4, fixed_abs, tag = 'smem constant byte address 0x4 - core index']
  #allocation1 [shape = 'u32[72,128]{1,0:T(1,128)}', space=vmem, size = 0x9000, scoped, tag = 'internal scratch']
  %s0 = inlined_call_operand.hbm [shape: bf16[2,2048], index: 0, kind: input, shape index: {}]
  %s1 = inlined_call_operand.hbm [shape: bf16[2048,128], index: 1, kind: input, shape index: {}]
  %s2 = inlined_call_operand.vmem [shape: f32[1,128], index: 2, kind: input, shape index: {}]
  %s3 = inlined_call_operand.hbm [shape: f32[2,128], index: 3, kind: output, shape index: {}]
  %s4 = sld [smem:[#allocation0]]
  $region30: #{tpu_custom_call.1} parent=0
    _
  %s6 = ssub.s32 1, %s4
  %s7 = scalar_select 0, %s6, %s4
  $region1: #{tpu_custom_call.1} parent=0
    #allocation2 [shape = 'u8[32768]{0}', space=vmem, size = 0x8000, scoped, tag = 'input window, operand 0, single buffered']
    #allocation3 [shape = 's32[1]{0}', space=sflag, size = 0x4, scoped, tag = 'scoped memory for tpu_custom_call.1']
    #allocation4 [shape = 's32[1]{0}', space=sflag, size = 0x4, scoped, tag = 'scoped memory for tpu_custom_call.1']
    #allocation5 [shape = 'u8[524288]{0}', space=vmem, size = 0x80000, scoped, tag = 'input window, operand 1, single buffered']
    #allocation6 [shape = 's32[1]{0}', space=sflag, size = 0x4, scoped, tag = 'scoped memory for tpu_custom_call.1']
    #allocation7 [shape = 'u8[4096]{0}', space=vmem, size = 0x1000, scoped, tag = 'output window, operand 0, single buffered']
    %8 = vsyncpa [#allocation3], 0
    %9 = vsyncpa [#allocation6], 0
    %10 = vsyncpa [#allocation4], 0
    // Predicated region
    $region2: #{tpu_custom_call.1} parent=1 // pred_check
      _
    $region3: #{tpu_custom_call.1} parent=1 // pred_check_branch
      %12 = sbr.rel (0) target = $region5
    $region4: #{tpu_custom_call.1} parent=1 // pred_region
      %14 = vsyncadd [#allocation3], 768
      %s15 = sshll.u32 %s0, 4
      %s16 = int_to_ptr.hbm [resolvable:$true] %s15
      %s17 = sshll.u32 [#allocation2], 4
      %s18 = int_to_ptr.vmem [resolvable:$true] %s17
      %23 = dma.hbm_to_vmem [thread:$0]  %s16, 256, %s18, [#allocation3], 256, 256, 16
    $region5: #{tpu_custom_call.1} parent=1 // pred_fallthru
      _
    // Predicated region
    $region6: #{tpu_custom_call.1} parent=1 // pred_check
      _
    $region7: #{tpu_custom_call.1} parent=1 // pred_check_branch
      %25 = sbr.rel (0) target = $region9
    $region8: #{tpu_custom_call.1} parent=1 // pred_region
      %27 = vsyncadd [#allocation6], 0
      %s28 = sshll.u32 %s1, 4
      %s29 = int_to_ptr.hbm [resolvable:$true] %s28
      %s30 = sshll.u32 [#allocation5], 4
      %s31 = int_to_ptr.vmem [resolvable:$true] %s30
      %36 = dma.hbm_to_vmem [thread:$0]  %s29, 16384, %s31, [#allocation6], 64, 64, 4
    $region9: #{tpu_custom_call.1} parent=1 // pred_fallthru
      _
    // Predicated region
    $region10: #{tpu_custom_call.1} parent=1 // pred_check
      _
    $region11: #{tpu_custom_call.1} parent=1 // pred_check_branch
      %38 = sbr.rel (0) target = $region13
    $region12: #{tpu_custom_call.1} parent=1 // pred_region
      _
    $region13: #{tpu_custom_call.1} parent=1 // pred_fallthru
      _
    // Predicated region
    $region14: #{tpu_custom_call.1} parent=1 // pred_check
      _
    $region15: #{tpu_custom_call.1} parent=1 // pred_check_branch
      %40 = sbr.rel (0) target = $region17
    $region16: #{tpu_custom_call.1} parent=1 // pred_region
      %42 = dma.done [#allocation3], 1024
    $region17: #{tpu_custom_call.1} parent=1 // pred_fallthru
      _
    // Predicated region
    $region18: #{tpu_custom_call.1} parent=1 // pred_check
      _
    $region19: #{tpu_custom_call.1} parent=1 // pred_check_branch
      %44 = sbr.rel (0) target = $region21
    $region20: #{tpu_custom_call.1} parent=1 // pred_region
      %46 = dma.done [#allocation6], 16384
    $region21: #{tpu_custom_call.1} parent=1 // pred_fallthru
      _
    %v47 = vld [vmem:[#allocation2] sm:$0xff]
    %v48 = vld [vmem:[#allocation2 + $0x8] sm:$0xff]
    %v49 = vld [vmem:[#allocation2 + $0x10] sm:$0xff]
    %v50 = vld [vmem:[#allocation2 + $0x18] sm:$0xff]
    %v51 = vld [vmem:[#allocation2 + $0x20] sm:$0xff]
    %v52 = vld [vmem:[#allocation2 + $0x28] sm:$0xff]
    %v53 = vld [vmem:[#allocation2 + $0x30] sm:$0xff]
    %v54 = vld [vmem:[#allocation2 + $0x38] sm:$0xff]
    %v55 = vld [vmem:[#allocation5] sm:$0xf]
    %v56 = vld [vmem:[#allocation5 + $0x4] sm:$0xf]
    %v57 = vld [vmem:[#allocation5 + $0x8] sm:$0xf]
    %v58 = vld [vmem:[#allocation5 + $0xc] sm:$0xf]
    %v59 = vld [vmem:[#allocation5 + $0x10] sm:$0xf]
    %v60 = vld [vmem:[#allocation5 + $0x14] sm:$0xf]
    %v61 = vld [vmem:[#allocation5 + $0x18] sm:$0xf]
    %v62 = vld [vmem:[#allocation5 + $0x1c] sm:$0xf]
    %v63 = vld [vmem:[#allocation5 + $0x20] sm:$0xf]
    %v64 = vld [vmem:[#allocation5 + $0x24] sm:$0xf]
    %v65 = vld [vmem:[#allocation5 + $0x28] sm:$0xf]
    %v66 = vld [vmem:[#allocation5 + $0x2c] sm:$0xf]
    %v67 = vld [vmem:[#allocation5 + $0x30] sm:$0xf]
    %v68 = vld [vmem:[#allocation5 + $0x34] sm:$0xf]
    %v69 = vld [vmem:[#allocation5 + $0x38] sm:$0xf]
    %v70 = vld [vmem:[#allocation5 + $0x3c] sm:$0xf]
    %v71 = vld [vmem:[#allocation5 + $0x40] sm:$0xf]
    %v72 = vld [vmem:[#allocation5 + $0x44] sm:$0xf]
    %v73 = vld [vmem:[#allocation5 + $0x48] sm:$0xf]
    %v74 = vld [vmem:[#allocation5 + $0x4c] sm:$0xf]
    %v75 = vld [vmem:[#allocation5 + $0x50] sm:$0xf]
    %v76 = vld [vmem:[#allocation5 + $0x54] sm:$0xf]
    %v77 = vld [vmem:[#allocation5 + $0x58] sm:$0xf]
    %v78 = vld [vmem:[#allocation5 + $0x5c] sm:$0xf]
    %v79 = vld [vmem:[#allocation5 + $0x60] sm:$0xf]
    %v80 = vld [vmem:[#allocation5 + $0x64] sm:$0xf]
    %v81 = vld [vmem:[#allocation5 + $0x68] sm:$0xf]
    %v82 = vld [vmem:[#allocation5 + $0x6c] sm:$0xf]
    %v83 = vld [vmem:[#allocation5 + $0x70] sm:$0xf]
    %v84 = vld [vmem:[#allocation5 + $0x74] sm:$0xf]
    %v85 = vld [vmem:[#allocation5 + $0x78] sm:$0xf]
    %v86 = vld [vmem:[#allocation5 + $0x7c] sm:$0xf]
    %v87 = vld [vmem:[#allocation5 + $0x80] sm:$0xf]
    %v88 = vld [vmem:[#allocation5 + $0x84] sm:$0xf]
    %v89 = vld [vmem:[#allocation5 + $0x88] sm:$0xf]
    %v90 = vld [vmem:[#allocation5 + $0x8c] sm:$0xf]
    %v91 = vld [vmem:[#allocation5 + $0x90] sm:$0xf]
    %v92 = vld [vmem:[#allocation5 + $0x94] sm:$0xf]
    %v93 = vld [vmem:[#allocation5 + $0x98] sm:$0xf]
    %v94 = vld [vmem:[#allocation5 + $0x9c] sm:$0xf]
    %v95 = vld [vmem:[#allocation5 + $0xa0] sm:$0xf]
    %v96 = vld [vmem:[#allocation5 + $0xa4] sm:$0xf]
    %v97 = vld [vmem:[#allocation5 + $0xa8] sm:$0xf]
    %v98 = vld [vmem:[#allocation5 + $0xac] sm:$0xf]
    %v99 = vld [vmem:[#allocation5 + $0xb0] sm:$0xf]
    %v100 = vld [vmem:[#allocation5 + $0xb4] sm:$0xf]
    %v101 = vld [vmem:[#allocation5 + $0xb8] sm:$0xf]
    %v102 = vld [vmem:[#allocation5 + $0xbc] sm:$0xf]
    %v103 = vld [vmem:[#allocation5 + $0xc0] sm:$0xf]
    %v104 = vld [vmem:[#allocation5 + $0xc4] sm:$0xf]
    %v105 = vld [vmem:[#allocation5 + $0xc8] sm:$0xf]
    %v106 = vld [vmem:[#allocation5 + $0xcc] sm:$0xf]
    %v107 = vld [vmem:[#allocation5 + $0xd0] sm:$0xf]
    %v108 = vld [vmem:[#allocation5 + $0xd4] sm:$0xf]
    %v109 = vld [vmem:[#allocation5 + $0xd8] sm:$0xf]
    %v110 = vld [vmem:[#allocation5 + $0xdc] sm:$0xf]
    %v111 = vld [vmem:[#allocation5 + $0xe0] sm:$0xf]
    %v112 = vld [vmem:[#allocation5 + $0xe4] sm:$0xf]
    %v113 = vld [vmem:[#allocation5 + $0xe8] sm:$0xf]
    %v114 = vld [vmem:[#allocation5 + $0xec] sm:$0xf]
    %v115 = vld [vmem:[#allocation5 + $0xf0] sm:$0xf]
    %v116 = vld [vmem:[#allocation5 + $0xf4] sm:$0xf]
    %v117 = vld [vmem:[#allocation5 + $0xf8] sm:$0xf]
    %v118 = vld [vmem:[#allocation5 + $0xfc] sm:$0xf]
    %v119 = vld [vmem:[#allocation5 + $0x100] sm:$0xf]
    %v120 = vld [vmem:[#allocation5 + $0x104] sm:$0xf]
    %v121 = vld [vmem:[#allocation5 + $0x108] sm:$0xf]
    %v122 = vld [vmem:[#allocation5 + $0x10c] sm:$0xf]
    %v123 = vld [vmem:[#allocation5 + $0x110] sm:$0xf]
    %v124 = vld [vmem:[#allocation5 + $0x114] sm:$0xf]
    %v125 = vld [vmem:[#allocation5 + $0x118] sm:$0xf]
    %v126 = vld [vmem:[#allocation5 + $0x11c] sm:$0xf]
    %v127 = vld [vmem:[#allocation5 + $0x120] sm:$0xf]
    %v128 = vld [vmem:[#allocation5 + $0x124] sm:$0xf]
    %v129 = vld [vmem:[#allocation5 + $0x128] sm:$0xf]
    %v130 = vld [vmem:[#allocation5 + $0x12c] sm:$0xf]
    %v131 = vld [vmem:[#allocation5 + $0x130] sm:$0xf]
    %v132 = vld [vmem:[#allocation5 + $0x134] sm:$0xf]
    %v133 = vld [vmem:[#allocation5 + $0x138] sm:$0xf]
    %v134 = vld [vmem:[#allocation5 + $0x13c] sm:$0xf]
    %v135 = vld [vmem:[#allocation5 + $0x140] sm:$0xf]
    %v136 = vld [vmem:[#allocation5 + $0x144] sm:$0xf]
    %v137 = vld [vmem:[#allocation5 + $0x148] sm:$0xf]
    %v138 = vld [vmem:[#allocation5 + $0x14c] sm:$0xf]
    %v139 = vld [vmem:[#allocation5 + $0x150] sm:$0xf]
    %v140 = vld [vmem:[#allocation5 + $0x154] sm:$0xf]
    %v141 = vld [vmem:[#allocation5 + $0x158] sm:$0xf]
    %v142 = vld [vmem:[#allocation5 + $0x15c] sm:$0xf]
    %v143 = vld [vmem:[#allocation5 + $0x160] sm:$0xf]
    %v144 = vld [vmem:[#allocation5 + $0x164] sm:$0xf]
    %v145 = vld [vmem:[#allocation5 + $0x168] sm:$0xf]
    %v146 = vld [vmem:[#allocation5 + $0x16c] sm:$0xf]
    %v147 = vld [vmem:[#allocation5 + $0x170] sm:$0xf]
    %v148 = vld [vmem:[#allocation5 + $0x174] sm:$0xf]
    %v149 = vld [vmem:[#allocation5 + $0x178] sm:$0xf]
    %v150 = vld [vmem:[#allocation5 + $0x17c] sm:$0xf]
    %v151 = vld [vmem:[#allocation5 + $0x180] sm:$0xf]
    %v152 = vld [vmem:[#allocation5 + $0x184] sm:$0xf]
    %v153 = vld [vmem:[#allocation5 + $0x188] sm:$0xf]
    %v154 = vld [vmem:[#allocation5 + $0x18c] sm:$0xf]
    %v155 = vld [vmem:[#allocation5 + $0x190] sm:$0xf]
    %v156 = vld [vmem:[#allocation5 + $0x194] sm:$0xf]
    %v157 = vld [vmem:[#allocation5 + $0x198] sm:$0xf]
    %v158 = vld [vmem:[#allocation5 + $0x19c] sm:$0xf]
    %v159 = vld [vmem:[#allocation5 + $0x1a0] sm:$0xf]
    %v160 = vld [vmem:[#allocation5 + $0x1a4] sm:$0xf]
    %v161 = vld [vmem:[#allocation5 + $0x1a8] sm:$0xf]
    %v162 = vld [vmem:[#allocation5 + $0x1ac] sm:$0xf]
    %v163 = vld [vmem:[#allocation5 + $0x1b0] sm:$0xf]
    %v164 = vld [vmem:[#allocation5 + $0x1b4] sm:$0xf]
    %v165 = vld [vmem:[#allocation5 + $0x1b8] sm:$0xf]
    %v166 = vld [vmem:[#allocation5 + $0x1bc] sm:$0xf]
    %v167 = vld [vmem:[#allocation5 + $0x1c0] sm:$0xf]
    %v168 = vld [vmem:[#allocation5 + $0x1c4] sm:$0xf]
    %v169 = vld [vmem:[#allocation5 + $0x1c8] sm:$0xf]
    %v170 = vld [vmem:[#allocation5 + $0x1cc] sm:$0xf]
    %v171 = vld [vmem:[#allocation5 + $0x1d0] sm:$0xf]
    %v172 = vld [vmem:[#allocation5 + $0x1d4] sm:$0xf]
    %v173 = vld [vmem:[#allocation5 + $0x1d8] sm:$0xf]
    %v174 = vld [vmem:[#allocation5 + $0x1dc] sm:$0xf]
    %v175 = vld [vmem:[#allocation5 + $0x1e0] sm:$0xf]
    %v176 = vld [vmem:[#allocation5 + $0x1e4] sm:$0xf]
    %v177 = vld [vmem:[#allocation5 + $0x1e8] sm:$0xf]
    %v178 = vld [vmem:[#allocation5 + $0x1ec] sm:$0xf]
    %v179 = vld [vmem:[#allocation5 + $0x1f0] sm:$0xf]
    %v180 = vld [vmem:[#allocation5 + $0x1f4] sm:$0xf]
    %v181 = vld [vmem:[#allocation5 + $0x1f8] sm:$0xf]
    %v182 = vld [vmem:[#allocation5 + $0x1fc] sm:$0xf]
    %v183 = vld [vmem:[#allocation5 + $0x200] sm:$0xf]
    %v184 = vld [vmem:[#allocation5 + $0x204] sm:$0xf]
    %v185 = vld [vmem:[#allocation5 + $0x208] sm:$0xf]
    %v186 = vld [vmem:[#allocation5 + $0x20c] sm:$0xf]
    %v187 = vld [vmem:[#allocation5 + $0x210] sm:$0xf]
    %v188 = vld [vmem:[#allocation5 + $0x214] sm:$0xf]
    %v189 = vld [vmem:[#allocation5 + $0x218] sm:$0xf]
    %v190 = vld [vmem:[#allocation5 + $0x21c] sm:$0xf]
    %v191 = vld [vmem:[#allocation5 + $0x220] sm:$0xf]
    %v192 = vld [vmem:[#allocation5 + $0x224] sm:$0xf]
    %v193 = vld [vmem:[#allocation5 + $0x228] sm:$0xf]
    %v194 = vld [vmem:[#allocation5 + $0x22c] sm:$0xf]
    %v195 = vld [vmem:[#allocation5 + $0x230] sm:$0xf]
    %v196 = vld [vmem:[#allocation5 + $0x234] sm:$0xf]
    %v197 = vld [vmem:[#allocation5 + $0x238] sm:$0xf]
    %v198 = vld [vmem:[#allocation5 + $0x23c] sm:$0xf]
    %v199 = vld [vmem:[#allocation5 + $0x240] sm:$0xf]
    %v200 = vld [vmem:[#allocation5 + $0x244] sm:$0xf]
    %v201 = vld [vmem:[#allocation5 + $0x248] sm:$0xf]
    %v202 = vld [vmem:[#allocation5 + $0x24c] sm:$0xf]
    %v203 = vld [vmem:[#allocation5 + $0x250] sm:$0xf]
    %v204 = vld [vmem:[#allocation5 + $0x254] sm:$0xf]
    %v205 = vld [vmem:[#allocation5 + $0x258] sm:$0xf]
    %v206 = vld [vmem:[#allocation5 + $0x25c] sm:$0xf]
    %v207 = vld [vmem:[#allocation5 + $0x260] sm:$0xf]
    %v208 = vld [vmem:[#allocation5 + $0x264] sm:$0xf]
    %v209 = vld [vmem:[#allocation5 + $0x268] sm:$0xf]
    %v210 = vld [vmem:[#allocation5 + $0x26c] sm:$0xf]
    %v211 = vld [vmem:[#allocation5 + $0x270] sm:$0xf]
    %v212 = vld [vmem:[#allocation5 + $0x274] sm:$0xf]
    %v213 = vld [vmem:[#allocation5 + $0x278] sm:$0xf]
    %v214 = vld [vmem:[#allocation5 + $0x27c] sm:$0xf]
    %v215 = vld [vmem:[#allocation5 + $0x280] sm:$0xf]
    %v216 = vld [vmem:[#allocation5 + $0x284] sm:$0xf]
    %v217 = vld [vmem:[#allocation5 + $0x288] sm:$0xf]
    %v218 = vld [vmem:[#allocation5 + $0x28c] sm:$0xf]
    %v219 = vld [vmem:[#allocation5 + $0x290] sm:$0xf]
    %v220 = vld [vmem:[#allocation5 + $0x294] sm:$0xf]
    %v221 = vld [vmem:[#allocation5 + $0x298] sm:$0xf]
    %v222 = vld [vmem:[#allocation5 + $0x29c] sm:$0xf]
    %v223 = vld [vmem:[#allocation5 + $0x2a0] sm:$0xf]
    %v224 = vld [vmem:[#allocation5 + $0x2a4] sm:$0xf]
    %v225 = vld [vmem:[#allocation5 + $0x2a8] sm:$0xf]
    %v226 = vld [vmem:[#allocation5 + $0x2ac] sm:$0xf]
    %v227 = vld [vmem:[#allocation5 + $0x2b0] sm:$0xf]
    %v228 = vld [vmem:[#allocation5 + $0x2b4] sm:$0xf]
    %v229 = vld [vmem:[#allocation5 + $0x2b8] sm:$0xf]
    %v230 = vld [vmem:[#allocation5 + $0x2bc] sm:$0xf]
    %v231 = vld [vmem:[#allocation5 + $0x2c0] sm:$0xf]
    %v232 = vld [vmem:[#allocation5 + $0x2c4] sm:$0xf]
    %v233 = vld [vmem:[#allocation5 + $0x2c8] sm:$0xf]
    %v234 = vld [vmem:[#allocation5 + $0x2cc] sm:$0xf]
    %v235 = vld [vmem:[#allocation5 + $0x2d0] sm:$0xf]
    %v236 = vld [vmem:[#allocation5 + $0x2d4] sm:$0xf]
    %v237 = vld [vmem:[#allocation5 + $0x2d8] sm:$0xf]
    %v238 = vld [vmem:[#allocation5 + $0x2dc] sm:$0xf]
    %v239 = vld [vmem:[#allocation5 + $0x2e0] sm:$0xf]
    %v240 = vld [vmem:[#allocation5 + $0x2e4] sm:$0xf]
    %v241 = vld [vmem:[#allocation5 + $0x2e8] sm:$0xf]
    %v242 = vld [vmem:[#allocation5 + $0x2ec] sm:$0xf]
    %v243 = vld [vmem:[#allocation5 + $0x2f0] sm:$0xf]
    %v244 = vld [vmem:[#allocation5 + $0x2f4] sm:$0xf]
    %v245 = vld [vmem:[#allocation5 + $0x2f8] sm:$0xf]
    %v246 = vld [vmem:[#allocation5 + $0x2fc] sm:$0xf]
    %v247 = vld [vmem:[#allocation5 + $0x300] sm:$0xf]
    %v248 = vld [vmem:[#allocation5 + $0x304] sm:$0xf]
    %v249 = vld [vmem:[#allocation5 + $0x308] sm:$0xf]
    %v250 = vld [vmem:[#allocation5 + $0x30c] sm:$0xf]
    %v251 = vld [vmem:[#allocation5 + $0x310] sm:$0xf]
    %v252 = vld [vmem:[#allocation5 + $0x314] sm:$0xf]
    %v253 = vld [vmem:[#allocation5 + $0x318] sm:$0xf]
    %v254 = vld [vmem:[#allocation5 + $0x31c] sm:$0xf]
    %v255 = vld [vmem:[#allocation5 + $0x320] sm:$0xf]
    %v256 = vld [vmem:[#allocation5 + $0x324] sm:$0xf]
    %v257 = vld [vmem:[#allocation5 + $0x328] sm:$0xf]
    %v258 = vld [vmem:[#allocation5 + $0x32c] sm:$0xf]
    %v259 = vld [vmem:[#allocation5 + $0x330] sm:$0xf]
    %v260 = vld [vmem:[#allocation5 + $0x334] sm:$0xf]
    %v261 = vld [vmem:[#allocation5 + $0x338] sm:$0xf]
    %v262 = vld [vmem:[#allocation5 + $0x33c] sm:$0xf]
    %v263 = vld [vmem:[#allocation5 + $0x340] sm:$0xf]
    %v264 = vld [vmem:[#allocation5 + $0x344] sm:$0xf]
    %v265 = vld [vmem:[#allocation5 + $0x348] sm:$0xf]
    %v266 = vld [vmem:[#allocation5 + $0x34c] sm:$0xf]
    %v267 = vld [vmem:[#allocation5 + $0x350] sm:$0xf]
    %v268 = vld [vmem:[#allocation5 + $0x354] sm:$0xf]
    %v269 = vld [vmem:[#allocation5 + $0x358] sm:$0xf]
    %v270 = vld [vmem:[#allocation5 + $0x35c] sm:$0xf]
    %v271 = vld [vmem:[#allocation5 + $0x360] sm:$0xf]
    %v272 = vld [vmem:[#allocation5 + $0x364] sm:$0xf]
    %v273 = vld [vmem:[#allocation5 + $0x368] sm:$0xf]
    %v274 = vld [vmem:[#allocation5 + $0x36c] sm:$0xf]
    %v275 = vld [vmem:[#allocation5 + $0x370] sm:$0xf]
    %v276 = vld [vmem:[#allocation5 + $0x374] sm:$0xf]
    %v277 = vld [vmem:[#allocation5 + $0x378] sm:$0xf]
    %v278 = vld [vmem:[#allocation5 + $0x37c] sm:$0xf]
    %v279 = vld [vmem:[#allocation5 + $0x380] sm:$0xf]
    %v280 = vld [vmem:[#allocation5 + $0x384] sm:$0xf]
    %v281 = vld [vmem:[#allocation5 + $0x388] sm:$0xf]
    %v282 = vld [vmem:[#allocation5 + $0x38c] sm:$0xf]
    %v283 = vld [vmem:[#allocation5 + $0x390] sm:$0xf]
    %v284 = vld [vmem:[#allocation5 + $0x394] sm:$0xf]
    %v285 = vld [vmem:[#allocation5 + $0x398] sm:$0xf]
    %v286 = vld [vmem:[#allocation5 + $0x39c] sm:$0xf]
    %v287 = vld [vmem:[#allocation5 + $0x3a0] sm:$0xf]
    %v288 = vld [vmem:[#allocation5 + $0x3a4] sm:$0xf]
    %v289 = vld [vmem:[#allocation5 + $0x3a8] sm:$0xf]
    %v290 = vld [vmem:[#allocation5 + $0x3ac] sm:$0xf]
    %v291 = vld [vmem:[#allocation5 + $0x3b0] sm:$0xf]
    %v292 = vld [vmem:[#allocation5 + $0x3b4] sm:$0xf]
    %v293 = vld [vmem:[#allocation5 + $0x3b8] sm:$0xf]
    %v294 = vld [vmem:[#allocation5 + $0x3bc] sm:$0xf]
    %v295 = vld [vmem:[#allocation5 + $0x3c0] sm:$0xf]
    %v296 = vld [vmem:[#allocation5 + $0x3c4] sm:$0xf]
    %v297 = vld [vmem:[#allocation5 + $0x3c8] sm:$0xf]
    %v298 = vld [vmem:[#allocation5 + $0x3cc] sm:$0xf]
    %v299 = vld [vmem:[#allocation5 + $0x3d0] sm:$0xf]
    %v300 = vld [vmem:[#allocation5 + $0x3d4] sm:$0xf]
    %v301 = vld [vmem:[#allocation5 + $0x3d8] sm:$0xf]
    %v302 = vld [vmem:[#allocation5 + $0x3dc] sm:$0xf]
    %v303 = vld [vmem:[#allocation5 + $0x3e0] sm:$0xf]
    %v304 = vld [vmem:[#allocation5 + $0x3e4] sm:$0xf]
    %v305 = vld [vmem:[#allocation5 + $0x3e8] sm:$0xf]
    %v306 = vld [vmem:[#allocation5 + $0x3ec] sm:$0xf]
    %v307 = vld [vmem:[#allocation5 + $0x3f0] sm:$0xf]
    %v308 = vld [vmem:[#allocation5 + $0x3f4] sm:$0xf]
    %v309 = vld [vmem:[#allocation5 + $0x3f8] sm:$0xf]
    %v310 = vld [vmem:[#allocation5 + $0x3fc] sm:$0xf]
    %v311 = vld [vmem:[%s2] sm:$0x1]
    %v313 = vperm.slane %v311, 0
    %316 = vst [vmem:[#allocation1] ss:$9 sm:$0xff] %v47
    %s318 = scalar_lea.vmem [#allocation1], 1
    %319 = vst [vmem:[%s318] ss:$9 sm:$0xff] %v49
    %s321 = scalar_lea.vmem [#allocation1], 2
    %322 = vst [vmem:[%s321] ss:$9 sm:$0xff] %v51
    %s324 = scalar_lea.vmem [#allocation1], 3
    %325 = vst [vmem:[%s324] ss:$9 sm:$0xff] %v53
    %v326 = vld [vmem:[#allocation1] sm:$0xff]
    %v327 = vld [vmem:[#allocation1 + $0x9] sm:$0xff]
    %v328 = vld [vmem:[#allocation1 + $0x12] sm:$0xff]
    %v329 = vld [vmem:[#allocation1 + $0x1b] sm:$0xff]
    %v330 = vld [vmem:[#allocation1 + $0x24] sm:$0xff]
    %v331 = vld [vmem:[#allocation1 + $0x2d] sm:$0xff]
    %v332 = vld [vmem:[#allocation1 + $0x36] sm:$0xff]
    %v333 = vld [vmem:[#allocation1 + $0x3f] sm:$0xff]
    %335 = vst [vmem:[#allocation1] ss:$9 sm:$0xff] %v48
    %337 = vst [vmem:[%s318] ss:$9 sm:$0xff] %v50
    %339 = vst [vmem:[%s321] ss:$9 sm:$0xff] %v52
    %341 = vst [vmem:[%s324] ss:$9 sm:$0xff] %v54
    %v342 = vld [vmem:[#allocation1] sm:$0xff]
    %v343 = vld [vmem:[#allocation1 + $0x9] sm:$0xff]
    %v344 = vld [vmem:[#allocation1 + $0x12] sm:$0xff]
    %v345 = vld [vmem:[#allocation1 + $0x1b] sm:$0xff]
    %v346 = vld [vmem:[#allocation1 + $0x24] sm:$0xff]
    %v347 = vld [vmem:[#allocation1 + $0x2d] sm:$0xff]
    %v348 = vld [vmem:[#allocation1 + $0x36] sm:$0xff]
    %v349 = vld [vmem:[#allocation1 + $0x3f] sm:$0xff]
    %v622 = vunpack.c.l.b16 %v55
    %v623 = vunpack.c.l.b16 %v56
    %v624 = vunpack.c.l.b16 %v57
    %v625 = vunpack.c.l.b16 %v58
    %v626 = vunpack.c.l.b16 %v59
    %v627 = vunpack.c.l.b16 %v60
    %v628 = vunpack.c.l.b16 %v61
    %v629 = vunpack.c.l.b16 %v62
    %v630 = vunpack.c.l.b16 %v63
    %v631 = vunpack.c.l.b16 %v64
    %v632 = vunpack.c.l.b16 %v65
    %v633 = vunpack.c.l.b16 %v66
    %v634 = vunpack.c.l.b16 %v67
    %v635 = vunpack.c.l.b16 %v68
    %v636 = vunpack.c.l.b16 %v69
    %v637 = vunpack.c.l.b16 %v70
    %v638 = vunpack.c.l.b16 %v71
    %v639 = vunpack.c.l.b16 %v72
    %v640 = vunpack.c.l.b16 %v73
    %v641 = vunpack.c.l.b16 %v74
    %v642 = vunpack.c.l.b16 %v75
    %v643 = vunpack.c.l.b16 %v76
    %v644 = vunpack.c.l.b16 %v77
    %v645 = vunpack.c.l.b16 %v78
    %v646 = vunpack.c.l.b16 %v79
    %v647 = vunpack.c.l.b16 %v80
    %v648 = vunpack.c.l.b16 %v81
    %v649 = vunpack.c.l.b16 %v82
    %v650 = vunpack.c.l.b16 %v83
    %v651 = vunpack.c.l.b16 %v84
    %v652 = vunpack.c.l.b16 %v85
    %v653 = vunpack.c.l.b16 %v86
    %v654 = vunpack.c.l.b16 %v87
    %v655 = vunpack.c.l.b16 %v88
    %v656 = vunpack.c.l.b16 %v89
    %v657 = vunpack.c.l.b16 %v90
    %v658 = vunpack.c.l.b16 %v91
    %v659 = vunpack.c.l.b16 %v92
    %v660 = vunpack.c.l.b16 %v93
    %v661 = vunpack.c.l.b16 %v94
    %v662 = vunpack.c.l.b16 %v95
    %v663 = vunpack.c.l.b16 %v96
    %v664 = vunpack.c.l.b16 %v97
    %v665 = vunpack.c.l.b16 %v98
    %v666 = vunpack.c.l.b16 %v99
    %v667 = vunpack.c.l.b16 %v100
    %v668 = vunpack.c.l.b16 %v101
    %v669 = vunpack.c.l.b16 %v102
    %v670 = vunpack.c.l.b16 %v103
    %v671 = vunpack.c.l.b16 %v104
    %v672 = vunpack.c.l.b16 %v105
    %v673 = vunpack.c.l.b16 %v106
    %v674 = vunpack.c.l.b16 %v107
    %v675 = vunpack.c.l.b16 %v108
    %v676 = vunpack.c.l.b16 %v109
    %v677 = vunpack.c.l.b16 %v110
    %v678 = vunpack.c.l.b16 %v111
    %v679 = vunpack.c.l.b16 %v112
    %v680 = vunpack.c.l.b16 %v113
    %v681 = vunpack.c.l.b16 %v114
    %v682 = vunpack.c.l.b16 %v115
    %v683 = vunpack.c.l.b16 %v116
    %v684 = vunpack.c.l.b16 %v117
    %v685 = vunpack.c.l.b16 %v118
    %v686 = vunpack.c.l.b16 %v119
    %v687 = vunpack.c.l.b16 %v120
    %v688 = vunpack.c.l.b16 %v121
    %v689 = vunpack.c.l.b16 %v122
    %v690 = vunpack.c.l.b16 %v123
    %v691 = vunpack.c.l.b16 %v124
    %v692 = vunpack.c.l.b16 %v125
    %v693 = vunpack.c.l.b16 %v126
    %v694 = vunpack.c.l.b16 %v127
    %v695 = vunpack.c.l.b16 %v128
    %v696 = vunpack.c.l.b16 %v129
    %v697 = vunpack.c.l.b16 %v130
    %v698 = vunpack.c.l.b16 %v131
    %v699 = vunpack.c.l.b16 %v132
    %v700 = vunpack.c.l.b16 %v133
    %v701 = vunpack.c.l.b16 %v134
    %v702 = vunpack.c.l.b16 %v135
    %v703 = vunpack.c.l.b16 %v136
    %v704 = vunpack.c.l.b16 %v137
    %v705 = vunpack.c.l.b16 %v138
    %v706 = vunpack.c.l.b16 %v139
    %v707 = vunpack.c.l.b16 %v140
    %v708 = vunpack.c.l.b16 %v141
    %v709 = vunpack.c.l.b16 %v142
    %v710 = vunpack.c.l.b16 %v143
    %v711 = vunpack.c.l.b16 %v144
    %v712 = vunpack.c.l.b16 %v145
    %v713 = vunpack.c.l.b16 %v146
    %v714 = vunpack.c.l.b16 %v147
    %v715 = vunpack.c.l.b16 %v148
    %v716 = vunpack.c.l.b16 %v149
    %v717 = vunpack.c.l.b16 %v150
    %v718 = vunpack.c.l.b16 %v151
    %v719 = vunpack.c.l.b16 %v152
    %v720 = vunpack.c.l.b16 %v153
    %v721 = vunpack.c.l.b16 %v154
    %v722 = vunpack.c.l.b16 %v155
    %v723 = vunpack.c.l.b16 %v156
    %v724 = vunpack.c.l.b16 %v157
    %v725 = vunpack.c.l.b16 %v158
    %v726 = vunpack.c.l.b16 %v159
    %v727 = vunpack.c.l.b16 %v160
    %v728 = vunpack.c.l.b16 %v161
    %v729 = vunpack.c.l.b16 %v162
    %v730 = vunpack.c.l.b16 %v163
    %v731 = vunpack.c.l.b16 %v164
    %v732 = vunpack.c.l.b16 %v165
    %v733 = vunpack.c.l.b16 %v166
    %v734 = vunpack.c.l.b16 %v167
    %v735 = vunpack.c.l.b16 %v168
    %v736 = vunpack.c.l.b16 %v169
    %v737 = vunpack.c.l.b16 %v170
    %v738 = vunpack.c.l.b16 %v171
    %v739 = vunpack.c.l.b16 %v172
    %v740 = vunpack.c.l.b16 %v173
    %v741 = vunpack.c.l.b16 %v174
    %v742 = vunpack.c.l.b16 %v175
    %v743 = vunpack.c.l.b16 %v176
    %v744 = vunpack.c.l.b16 %v177
    %v745 = vunpack.c.l.b16 %v178
    %v746 = vunpack.c.l.b16 %v179
    %v747 = vunpack.c.l.b16 %v180
    %v748 = vunpack.c.l.b16 %v181
    %v749 = vunpack.c.l.b16 %v182
    %v750 = vunpack.c.l.b16 %v183
    %v751 = vunpack.c.l.b16 %v184
    %v752 = vunpack.c.l.b16 %v185
    %v753 = vunpack.c.l.b16 %v186
    %v754 = vunpack.c.l.b16 %v187
    %v755 = vunpack.c.l.b16 %v188
    %v756 = vunpack.c.l.b16 %v189
    %v757 = vunpack.c.l.b16 %v190
    %v758 = vunpack.c.l.b16 %v191
    %v759 = vunpack.c.l.b16 %v192
    %v760 = vunpack.c.l.b16 %v193
    %v761 = vunpack.c.l.b16 %v194
    %v762 = vunpack.c.l.b16 %v195
    %v763 = vunpack.c.l.b16 %v196
    %v764 = vunpack.c.l.b16 %v197
    %v765 = vunpack.c.l.b16 %v198
    %v766 = vunpack.c.l.b16 %v199
    %v767 = vunpack.c.l.b16 %v200
    %v768 = vunpack.c.l.b16 %v201
    %v769 = vunpack.c.l.b16 %v202
    %v770 = vunpack.c.l.b16 %v203
    %v771 = vunpack.c.l.b16 %v204
    %v772 = vunpack.c.l.b16 %v205
    %v773 = vunpack.c.l.b16 %v206
    %v774 = vunpack.c.l.b16 %v207
    %v775 = vunpack.c.l.b16 %v208
    %v776 = vunpack.c.l.b16 %v209
    %v777 = vunpack.c.l.b16 %v210
    %v778 = vunpack.c.l.b16 %v211
    %v779 = vunpack.c.l.b16 %v212
    %v780 = vunpack.c.l.b16 %v213
    %v781 = vunpack.c.l.b16 %v214
    %v782 = vunpack.c.l.b16 %v215
    %v783 = vunpack.c.l.b16 %v216
    %v784 = vunpack.c.l.b16 %v217
    %v785 = vunpack.c.l.b16 %v218
    %v786 = vunpack.c.l.b16 %v219
    %v787 = vunpack.c.l.b16 %v220
    %v788 = vunpack.c.l.b16 %v221
    %v789 = vunpack.c.l.b16 %v222
    %v790 = vunpack.c.l.b16 %v223
    %v791 = vunpack.c.l.b16 %v224
    %v792 = vunpack.c.l.b16 %v225
    %v793 = vunpack.c.l.b16 %v226
    %v794 = vunpack.c.l.b16 %v227
    %v795 = vunpack.c.l.b16 %v228
    %v796 = vunpack.c.l.b16 %v229
    %v797 = vunpack.c.l.b16 %v230
    %v798 = vunpack.c.l.b16 %v231
    %v799 = vunpack.c.l.b16 %v232
    %v800 = vunpack.c.l.b16 %v233
    %v801 = vunpack.c.l.b16 %v234
    %v802 = vunpack.c.l.b16 %v235
    %v803 = vunpack.c.l.b16 %v236
    %v804 = vunpack.c.l.b16 %v237
    %v805 = vunpack.c.l.b16 %v238
    %v806 = vunpack.c.l.b16 %v239
    %v807 = vunpack.c.l.b16 %v240
    %v808 = vunpack.c.l.b16 %v241
    %v809 = vunpack.c.l.b16 %v242
    %v810 = vunpack.c.l.b16 %v243
    %v811 = vunpack.c.l.b16 %v244
    %v812 = vunpack.c.l.b16 %v245
    %v813 = vunpack.c.l.b16 %v246
    %v814 = vunpack.c.l.b16 %v247
    %v815 = vunpack.c.l.b16 %v248
    %v816 = vunpack.c.l.b16 %v249
    %v817 = vunpack.c.l.b16 %v250
    %v818 = vunpack.c.l.b16 %v251
    %v819 = vunpack.c.l.b16 %v252
    %v820 = vunpack.c.l.b16 %v253
    %v821 = vunpack.c.l.b16 %v254
    %v822 = vunpack.c.l.b16 %v255
    %v823 = vunpack.c.l.b16 %v256
    %v824 = vunpack.c.l.b16 %v257
    %v825 = vunpack.c.l.b16 %v258
    %v826 = vunpack.c.l.b16 %v259
    %v827 = vunpack.c.l.b16 %v260
    %v828 = vunpack.c.l.b16 %v261
    %v829 = vunpack.c.l.b16 %v262
    %v830 = vunpack.c.l.b16 %v263
    %v831 = vunpack.c.l.b16 %v264
    %v832 = vunpack.c.l.b16 %v265
    %v833 = vunpack.c.l.b16 %v266
    %v834 = vunpack.c.l.b16 %v267
    %v835 = vunpack.c.l.b16 %v268
    %v836 = vunpack.c.l.b16 %v269
    %v837 = vunpack.c.l.b16 %v270
    %v838 = vunpack.c.l.b16 %v271
    %v839 = vunpack.c.l.b16 %v272
    %v840 = vunpack.c.l.b16 %v273
    %v841 = vunpack.c.l.b16 %v274
    %v842 = vunpack.c.l.b16 %v275
    %v843 = vunpack.c.l.b16 %v276
    %v844 = vunpack.c.l.b16 %v277
    %v845 = vunpack.c.l.b16 %v278
    %v846 = vunpack.c.l.b16 %v279
    %v847 = vunpack.c.l.b16 %v280
    %v848 = vunpack.c.l.b16 %v281
    %v849 = vunpack.c.l.b16 %v282
    %v850 = vunpack.c.l.b16 %v283
    %v851 = vunpack.c.l.b16 %v284
    %v852 = vunpack.c.l.b16 %v285
    %v853 = vunpack.c.l.b16 %v286
    %v854 = vunpack.c.l.b16 %v287
    %v855 = vunpack.c.l.b16 %v288
    %v856 = vunpack.c.l.b16 %v289
    %v857 = vunpack.c.l.b16 %v290
    %v858 = vunpack.c.l.b16 %v291
    %v859 = vunpack.c.l.b16 %v292
    %v860 = vunpack.c.l.b16 %v293
    %v861 = vunpack.c.l.b16 %v294
    %v862 = vunpack.c.l.b16 %v295
    %v863 = vunpack.c.l.b16 %v296
    %v864 = vunpack.c.l.b16 %v297
    %v865 = vunpack.c.l.b16 %v298
    %v866 = vunpack.c.l.b16 %v299
    %v867 = vunpack.c.l.b16 %v300
    %v868 = vunpack.c.l.b16 %v301
    %v869 = vunpack.c.l.b16 %v302
    %v870 = vunpack.c.l.b16 %v303
    %v871 = vunpack.c.l.b16 %v304
    %v872 = vunpack.c.l.b16 %v305
    %v873 = vunpack.c.l.b16 %v306
    %v874 = vunpack.c.l.b16 %v307
    %v875 = vunpack.c.l.b16 %v308
    %v876 = vunpack.c.l.b16 %v309
    %v877 = vunpack.c.l.b16 %v310
    %v878 = vpack.c.b16 %v623, %v622
    %v879 = vpack.c.b16 %v625, %v624
    %v880 = vpack.c.b16 %v627, %v626
    %v881 = vpack.c.b16 %v629, %v628
    %v882 = vpack.c.b16 %v631, %v630
    %v883 = vpack.c.b16 %v633, %v632
    %v884 = vpack.c.b16 %v635, %v634
    %v885 = vpack.c.b16 %v637, %v636
    %v886 = vpack.c.b16 %v639, %v638
    %v887 = vpack.c.b16 %v641, %v640
    %v888 = vpack.c.b16 %v643, %v642
    %v889 = vpack.c.b16 %v645, %v644
    %v890 = vpack.c.b16 %v647, %v646
    %v891 = vpack.c.b16 %v649, %v648
    %v892 = vpack.c.b16 %v651, %v650
    %v893 = vpack.c.b16 %v653, %v652
    %v894 = vpack.c.b16 %v655, %v654
    %v895 = vpack.c.b16 %v657, %v656
    %v896 = vpack.c.b16 %v659, %v658
    %v897 = vpack.c.b16 %v661, %v660
    %v898 = vpack.c.b16 %v663, %v662
    %v899 = vpack.c.b16 %v665, %v664
    %v900 = vpack.c.b16 %v667, %v666
    %v901 = vpack.c.b16 %v669, %v668
    %v902 = vpack.c.b16 %v671, %v670
    %v903 = vpack.c.b16 %v673, %v672
    %v904 = vpack.c.b16 %v675, %v674
    %v905 = vpack.c.b16 %v677, %v676
    %v906 = vpack.c.b16 %v679, %v678
    %v907 = vpack.c.b16 %v681, %v680
    %v908 = vpack.c.b16 %v683, %v682
    %v909 = vpack.c.b16 %v685, %v684
    %v910 = vpack.c.b16 %v687, %v686
    %v911 = vpack.c.b16 %v689, %v688
    %v912 = vpack.c.b16 %v691, %v690
    %v913 = vpack.c.b16 %v693, %v692
    %v914 = vpack.c.b16 %v695, %v694
    %v915 = vpack.c.b16 %v697, %v696
    %v916 = vpack.c.b16 %v699, %v698
    %v917 = vpack.c.b16 %v701, %v700
    %v918 = vpack.c.b16 %v703, %v702
    %v919 = vpack.c.b16 %v705, %v704
    %v920 = vpack.c.b16 %v707, %v706
    %v921 = vpack.c.b16 %v709, %v708
    %v922 = vpack.c.b16 %v711, %v710
    %v923 = vpack.c.b16 %v713, %v712
    %v924 = vpack.c.b16 %v715, %v714
    %v925 = vpack.c.b16 %v717, %v716
    %v926 = vpack.c.b16 %v719, %v718
    %v927 = vpack.c.b16 %v721, %v720
    %v928 = vpack.c.b16 %v723, %v722
    %v929 = vpack.c.b16 %v725, %v724
    %v930 = vpack.c.b16 %v727, %v726
    %v931 = vpack.c.b16 %v729, %v728
    %v932 = vpack.c.b16 %v731, %v730
    %v933 = vpack.c.b16 %v733, %v732
    %v934 = vpack.c.b16 %v735, %v734
    %v935 = vpack.c.b16 %v737, %v736
    %v936 = vpack.c.b16 %v739, %v738
    %v937 = vpack.c.b16 %v741, %v740
    %v938 = vpack.c.b16 %v743, %v742
    %v939 = vpack.c.b16 %v745, %v744
    %v940 = vpack.c.b16 %v747, %v746
    %v941 = vpack.c.b16 %v749, %v748
    %v942 = vpack.c.b16 %v751, %v750
    %v943 = vpack.c.b16 %v753, %v752
    %v944 = vpack.c.b16 %v755, %v754
    %v945 = vpack.c.b16 %v757, %v756
    %v946 = vpack.c.b16 %v759, %v758
    %v947 = vpack.c.b16 %v761, %v760
    %v948 = vpack.c.b16 %v763, %v762
    %v949 = vpack.c.b16 %v765, %v764
    %v950 = vpack.c.b16 %v767, %v766
    %v951 = vpack.c.b16 %v769, %v768
    %v952 = vpack.c.b16 %v771, %v770
    %v953 = vpack.c.b16 %v773, %v772
    %v954 = vpack.c.b16 %v775, %v774
    %v955 = vpack.c.b16 %v777, %v776
    %v956 = vpack.c.b16 %v779, %v778
    %v957 = vpack.c.b16 %v781, %v780
    %v958 = vpack.c.b16 %v783, %v782
    %v959 = vpack.c.b16 %v785, %v784
    %v960 = vpack.c.b16 %v787, %v786
    %v961 = vpack.c.b16 %v789, %v788
    %v962 = vpack.c.b16 %v791, %v790
    %v963 = vpack.c.b16 %v793, %v792
    %v964 = vpack.c.b16 %v795, %v794
    %v965 = vpack.c.b16 %v797, %v796
    %v966 = vpack.c.b16 %v799, %v798
    %v967 = vpack.c.b16 %v801, %v800
    %v968 = vpack.c.b16 %v803, %v802
    %v969 = vpack.c.b16 %v805, %v804
    %v970 = vpack.c.b16 %v807, %v806
    %v971 = vpack.c.b16 %v809, %v808
    %v972 = vpack.c.b16 %v811, %v810
    %v973 = vpack.c.b16 %v813, %v812
    %v974 = vpack.c.b16 %v815, %v814
    %v975 = vpack.c.b16 %v817, %v816
    %v976 = vpack.c.b16 %v819, %v818
    %v977 = vpack.c.b16 %v821, %v820
    %v978 = vpack.c.b16 %v823, %v822
    %v979 = vpack.c.b16 %v825, %v824
    %v980 = vpack.c.b16 %v827, %v826
    %v981 = vpack.c.b16 %v829, %v828
    %v982 = vpack.c.b16 %v831, %v830
    %v983 = vpack.c.b16 %v833, %v832
    %v984 = vpack.c.b16 %v835, %v834
    %v985 = vpack.c.b16 %v837, %v836
    %v986 = vpack.c.b16 %v839, %v838
    %v987 = vpack.c.b16 %v841, %v840
    %v988 = vpack.c.b16 %v843, %v842
    %v989 = vpack.c.b16 %v845, %v844
    %v990 = vpack.c.b16 %v847, %v846
    %v991 = vpack.c.b16 %v849, %v848
    %v992 = vpack.c.b16 %v851, %v850
    %v993 = vpack.c.b16 %v853, %v852
    %v994 = vpack.c.b16 %v855, %v854
    %v995 = vpack.c.b16 %v857, %v856
    %v996 = vpack.c.b16 %v859, %v858
    %v997 = vpack.c.b16 %v861, %v860
    %v998 = vpack.c.b16 %v863, %v862
    %v999 = vpack.c.b16 %v865, %v864
    %v1000 = vpack.c.b16 %v867, %v866
    %v1001 = vpack.c.b16 %v869, %v868
    %v1002 = vpack.c.b16 %v871, %v870
    %v1003 = vpack.c.b16 %v873, %v872
    %v1004 = vpack.c.b16 %v875, %v874
    %v1005 = vpack.c.b16 %v877, %v876
    %1134 = vmatpush.bf16.msra.mxu0 %v885
    %1135 = vmatpush.bf16.msra.mxu0 %v884
    %1136 = vmatpush.bf16.msra.mxu0 %v883
    %1137 = vmatpush.bf16.msra.mxu0 %v882
    %1138 = vmatpush.bf16.msra.mxu0 %v881
    %1139 = vmatpush.bf16.msra.mxu0 %v880
    %1140 = vmatpush.bf16.msra.mxu0 %v879
    %1141 = vmatpush.bf16.msra.mxu0 %v878
    %1142 = vmatmul.bf16.gmra.mxu0 %v326
    %v1143 = vpop.f32.mrf.mxu0
    %v1144 = vadd.f32 %v313, %v1143
    %v1145 = vpop.f32.mrf.mxu0
    %1146 = vdwg.mxu0
    %1147 = vmatpush.bf16.msra.mxu0 %v893
    %1148 = vmatpush.bf16.msra.mxu0 %v892
    %1149 = vmatpush.bf16.msra.mxu0 %v891
    %1150 = vmatpush.bf16.msra.mxu0 %v890
    %1151 = vmatpush.bf16.msra.mxu0 %v889
    %1152 = vmatpush.bf16.msra.mxu0 %v888
    %1153 = vmatpush.bf16.msra.mxu0 %v887
    %1154 = vmatpush.bf16.msra.mxu0 %v886
    %1155 = vmatmul.bf16.gmra.mxu0 %v327
    %v1156 = vpop.f32.mrf.mxu0
    %v1157 = vadd.f32 %v1144, %v1156
    %v1158 = vpop.f32.mrf.mxu0
    %1159 = vdwg.mxu0
    %1160 = vmatpush.bf16.msra.mxu0 %v901
    %1161 = vmatpush.bf16.msra.mxu0 %v900
    %1162 = vmatpush.bf16.msra.mxu0 %v899
    %1163 = vmatpush.bf16.msra.mxu0 %v898
    %1164 = vmatpush.bf16.msra.mxu0 %v897
    %1165 = vmatpush.bf16.msra.mxu0 %v896
    %1166 = vmatpush.bf16.msra.mxu0 %v895
    %1167 = vmatpush.bf16.msra.mxu0 %v894
    %1168 = vmatmul.bf16.gmra.mxu0 %v328
    %v1169 = vpop.f32.mrf.mxu0
    %v1170 = vadd.f32 %v1157, %v1169
    %v1171 = vpop.f32.mrf.mxu0
    %1172 = vdwg.mxu0
    %1173 = vmatpush.bf16.msra.mxu0 %v909
    %1174 = vmatpush.bf16.msra.mxu0 %v908
    %1175 = vmatpush.bf16.msra.mxu0 %v907
    %1176 = vmatpush.bf16.msra.mxu0 %v906
    %1177 = vmatpush.bf16.msra.mxu0 %v905
    %1178 = vmatpush.bf16.msra.mxu0 %v904
    %1179 = vmatpush.bf16.msra.mxu0 %v903
    %1180 = vmatpush.bf16.msra.mxu0 %v902
    %1181 = vmatmul.bf16.gmra.mxu0 %v329
    %v1182 = vpop.f32.mrf.mxu0
    %v1183 = vadd.f32 %v1170, %v1182
    %v1184 = vpop.f32.mrf.mxu0
    %1185 = vdwg.mxu0
    %1186 = vmatpush.bf16.msra.mxu0 %v917
    %1187 = vmatpush.bf16.msra.mxu0 %v916
    %1188 = vmatpush.bf16.msra.mxu0 %v915
    %1189 = vmatpush.bf16.msra.mxu0 %v914
    %1190 = vmatpush.bf16.msra.mxu0 %v913
    %1191 = vmatpush.bf16.msra.mxu0 %v912
    %1192 = vmatpush.bf16.msra.mxu0 %v911
    %1193 = vmatpush.bf16.msra.mxu0 %v910
    %1194 = vmatmul.bf16.gmra.mxu0 %v330
    %v1195 = vpop.f32.mrf.mxu0
    %v1196 = vadd.f32 %v1183, %v1195
    %v1197 = vpop.f32.mrf.mxu0
    %1198 = vdwg.mxu0
    %1199 = vmatpush.bf16.msra.mxu0 %v925
    %1200 = vmatpush.bf16.msra.mxu0 %v924
    %1201 = vmatpush.bf16.msra.mxu0 %v923
    %1202 = vmatpush.bf16.msra.mxu0 %v922
    %1203 = vmatpush.bf16.msra.mxu0 %v921
    %1204 = vmatpush.bf16.msra.mxu0 %v920
    %1205 = vmatpush.bf16.msra.mxu0 %v919
    %1206 = vmatpush.bf16.msra.mxu0 %v918
    %1207 = vmatmul.bf16.gmra.mxu0 %v331
    %v1208 = vpop.f32.mrf.mxu0
    %v1209 = vadd.f32 %v1196, %v1208
    %v1210 = vpop.f32.mrf.mxu0
    %1211 = vdwg.mxu0
    %1212 = vmatpush.bf16.msra.mxu0 %v933
    %1213 = vmatpush.bf16.msra.mxu0 %v932
    %1214 = vmatpush.bf16.msra.mxu0 %v931
    %1215 = vmatpush.bf16.msra.mxu0 %v930
    %1216 = vmatpush.bf16.msra.mxu0 %v929
    %1217 = vmatpush.bf16.msra.mxu0 %v928
    %1218 = vmatpush.bf16.msra.mxu0 %v927
    %1219 = vmatpush.bf16.msra.mxu0 %v926
    %1220 = vmatmul.bf16.gmra.mxu0 %v332
    %v1221 = vpop.f32.mrf.mxu0
    %v1222 = vadd.f32 %v1209, %v1221
    %v1223 = vpop.f32.mrf.mxu0
    %1224 = vdwg.mxu0
    %1225 = vmatpush.bf16.msra.mxu0 %v941
    %1226 = vmatpush.bf16.msra.mxu0 %v940
    %1227 = vmatpush.bf16.msra.mxu0 %v939
    %1228 = vmatpush.bf16.msra.mxu0 %v938
    %1229 = vmatpush.bf16.msra.mxu0 %v937
    %1230 = vmatpush.bf16.msra.mxu0 %v936
    %1231 = vmatpush.bf16.msra.mxu0 %v935
    %1232 = vmatpush.bf16.msra.mxu0 %v934
    %1233 = vmatmul.bf16.gmra.mxu0 %v333
    %v1234 = vpop.f32.mrf.mxu0
    %v1235 = vadd.f32 %v1222, %v1234
    %v1236 = vpop.f32.mrf.mxu0
    %1237 = vdwg.mxu0
    %1238 = vmatpush.bf16.msra.mxu0 %v949
    %1239 = vmatpush.bf16.msra.mxu0 %v948
    %1240 = vmatpush.bf16.msra.mxu0 %v947
    %1241 = vmatpush.bf16.msra.mxu0 %v946
    %1242 = vmatpush.bf16.msra.mxu0 %v945
    %1243 = vmatpush.bf16.msra.mxu0 %v944
    %1244 = vmatpush.bf16.msra.mxu0 %v943
    %1245 = vmatpush.bf16.msra.mxu0 %v942
    %1246 = vmatmul.bf16.gmra.mxu0 %v342
    %v1247 = vpop.f32.mrf.mxu0
    %v1248 = vadd.f32 %v1235, %v1247
    %v1249 = vpop.f32.mrf.mxu0
    %1250 = vdwg.mxu0
    %1251 = vmatpush.bf16.msra.mxu0 %v957
    %1252 = vmatpush.bf16.msra.mxu0 %v956
    %1253 = vmatpush.bf16.msra.mxu0 %v955
    %1254 = vmatpush.bf16.msra.mxu0 %v954
    %1255 = vmatpush.bf16.msra.mxu0 %v953
    %1256 = vmatpush.bf16.msra.mxu0 %v952
    %1257 = vmatpush.bf16.msra.mxu0 %v951
    %1258 = vmatpush.bf16.msra.mxu0 %v950
    %1259 = vmatmul.bf16.gmra.mxu0 %v343
    %v1260 = vpop.f32.mrf.mxu0
    %v1261 = vadd.f32 %v1248, %v1260
    %v1262 = vpop.f32.mrf.mxu0
    %1263 = vdwg.mxu0
    %1264 = vmatpush.bf16.msra.mxu0 %v965
    %1265 = vmatpush.bf16.msra.mxu0 %v964
    %1266 = vmatpush.bf16.msra.mxu0 %v963
    %1267 = vmatpush.bf16.msra.mxu0 %v962
    %1268 = vmatpush.bf16.msra.mxu0 %v961
    %1269 = vmatpush.bf16.msra.mxu0 %v960
    %1270 = vmatpush.bf16.msra.mxu0 %v959
    %1271 = vmatpush.bf16.msra.mxu0 %v958
    %1272 = vmatmul.bf16.gmra.mxu0 %v344
    %v1273 = vpop.f32.mrf.mxu0
    %v1274 = vadd.f32 %v1261, %v1273
    %v1275 = vpop.f32.mrf.mxu0
    %1276 = vdwg.mxu0
    %1277 = vmatpush.bf16.msra.mxu0 %v973
    %1278 = vmatpush.bf16.msra.mxu0 %v972
    %1279 = vmatpush.bf16.msra.mxu0 %v971
    %1280 = vmatpush.bf16.msra.mxu0 %v970
    %1281 = vmatpush.bf16.msra.mxu0 %v969
    %1282 = vmatpush.bf16.msra.mxu0 %v968
    %1283 = vmatpush.bf16.msra.mxu0 %v967
    %1284 = vmatpush.bf16.msra.mxu0 %v966
    %1285 = vmatmul.bf16.gmra.mxu0 %v345
    %v1286 = vpop.f32.mrf.mxu0
    %v1287 = vadd.f32 %v1274, %v1286
    %v1288 = vpop.f32.mrf.mxu0
    %1289 = vdwg.mxu0
    %1290 = vmatpush.bf16.msra.mxu0 %v981
    %1291 = vmatpush.bf16.msra.mxu0 %v980
    %1292 = vmatpush.bf16.msra.mxu0 %v979
    %1293 = vmatpush.bf16.msra.mxu0 %v978
    %1294 = vmatpush.bf16.msra.mxu0 %v977
    %1295 = vmatpush.bf16.msra.mxu0 %v976
    %1296 = vmatpush.bf16.msra.mxu0 %v975
    %1297 = vmatpush.bf16.msra.mxu0 %v974
    %1298 = vmatmul.bf16.gmra.mxu0 %v346
    %v1299 = vpop.f32.mrf.mxu0
    %v1300 = vadd.f32 %v1287, %v1299
    %v1301 = vpop.f32.mrf.mxu0
    %1302 = vdwg.mxu0
    %1303 = vmatpush.bf16.msra.mxu0 %v989
    %1304 = vmatpush.bf16.msra.mxu0 %v988
    %1305 = vmatpush.bf16.msra.mxu0 %v987
    %1306 = vmatpush.bf16.msra.mxu0 %v986
    %1307 = vmatpush.bf16.msra.mxu0 %v985
    %1308 = vmatpush.bf16.msra.mxu0 %v984
    %1309 = vmatpush.bf16.msra.mxu0 %v983
    %1310 = vmatpush.bf16.msra.mxu0 %v982
    %1311 = vmatmul.bf16.gmra.mxu0 %v347
    %v1312 = vpop.f32.mrf.mxu0
    %v1313 = vadd.f32 %v1300, %v1312
    %v1314 = vpop.f32.mrf.mxu0
    %1315 = vdwg.mxu0
    %1316 = vmatpush.bf16.msra.mxu0 %v997
    %1317 = vmatpush.bf16.msra.mxu0 %v996
    %1318 = vmatpush.bf16.msra.mxu0 %v995
    %1319 = vmatpush.bf16.msra.mxu0 %v994
    %1320 = vmatpush.bf16.msra.mxu0 %v993
    %1321 = vmatpush.bf16.msra.mxu0 %v992
    %1322 = vmatpush.bf16.msra.mxu0 %v991
    %1323 = vmatpush.bf16.msra.mxu0 %v990
    %1324 = vmatmul.bf16.gmra.mxu0 %v348
    %v1325 = vpop.f32.mrf.mxu0
    %v1326 = vadd.f32 %v1313, %v1325
    %v1327 = vpop.f32.mrf.mxu0
    %1328 = vdwg.mxu0
    %1329 = vmatpush.bf16.msra.mxu0 %v1005
    %1330 = vmatpush.bf16.msra.mxu0 %v1004
    %1331 = vmatpush.bf16.msra.mxu0 %v1003
    %1332 = vmatpush.bf16.msra.mxu0 %v1002
    %1333 = vmatpush.bf16.msra.mxu0 %v1001
    %1334 = vmatpush.bf16.msra.mxu0 %v1000
    %1335 = vmatpush.bf16.msra.mxu0 %v999
    %1336 = vmatpush.bf16.msra.mxu0 %v998
    %1337 = vmatmul.bf16.gmra.mxu0 %v349
    %v1338 = vpop.f32.mrf.mxu0
    %v1339 = vadd.f32 %v1326, %v1338
    %v1340 = vpop.f32.mrf.mxu0
    %1341 = vdwg.mxu0
    %1342 = vst [vmem:[#allocation7] sm:$0xff] %v1339
    // Predicated region
    $region22: #{tpu_custom_call.1} parent=1 // pred_check
      _
    $region23: #{tpu_custom_call.1} parent=1 // pred_check_branch
      %1344 = sbr.rel (0) target = $region25
    $region24: #{tpu_custom_call.1} parent=1 // pred_region
      %1346 = vsyncadd [#allocation4], 96
      %s1347 = sshll.u32 [#allocation7], 4
      %s1348 = int_to_ptr.vmem [resolvable:$true] %s1347
      %s1349 = sshll.u32 %s3, 4
      %s1350 = int_to_ptr.hbm [resolvable:$true] %s1349
      %1355 = dma.vmem_to_hbm [thread:$0]  %s1348, 32, %s1350, [#allocation4], 32, 32, 2
    $region25: #{tpu_custom_call.1} parent=1 // pred_fallthru
      _
    // Predicated region
    $region26: #{tpu_custom_call.1} parent=1 // pred_check
      _
    $region27: #{tpu_custom_call.1} parent=1 // pred_check_branch
      %1357 = sbr.rel (0) target = $region29
    $region28: #{tpu_custom_call.1} parent=1 // pred_region
      %1359 = dma.done [#allocation4], 128
    $region29: #{tpu_custom_call.1} parent=1 // pred_fallthru
      _
    %1360 = vsyncpa [#allocation3], 1
    %1361 = vsyncpa [#allocation6], 1
    %1362 = vsyncpa [#allocation4], 1

</llo_original>
